<compile_context>
chip_gen: v6e
topology: v6e:2x2x1
jax: 0.10.0
libtpu: 0.0.40
codegen_flags: <defaults>
</compile_context>

<pallas_src>
import functools

import numpy as np
import jax
import jax.numpy as jnp
from jax.experimental import pallas as pl
from jax.experimental.pallas import tpu as pltpu


def _ceil_div(a, b):
    return -(-a // b)


def _round_up(a, b):
    return _ceil_div(a, b) * b


# ----------------------------------------------------------------------------
# Pallas kernel
# ----------------------------------------------------------------------------
def _acsl_kernel(logits_ref, rowaux_ref, colmasks_ref, out_ref, *, logit_thr, n_rows):
    s = pl.program_id(0)
    i = pl.program_id(1)

    # Per-shard resident accumulator: the output block index depends only on the
    # parallel shard axis, so it stays in VMEM across the inner ("arbitrary") axis.
    @pl.when(i == 0)
    def _():
        out_ref[...] = jnp.zeros_like(out_ref)

    x_raw = logits_ref[...]                                 # (tm, C) f32
    tm, c = x_raw.shape

    # Row-validity predicate from the *unclamped* global row offset of this block.
    # Mask x itself (not the wmask*loss product): the ragged tail block's VMEM is
    # unspecified and could hold Inf/NaN.
    row_start = (s * pl.num_programs(1) + i) * tm
    row_ids = jax.lax.broadcasted_iota(jnp.int32, (tm, 1), 0) + row_start
    row_ok = row_ids < n_rows
    x = jnp.where(row_ok, x_raw, jnp.float32(-1e9))         # very negative -> 0 loss, 0 mask

    aux = rowaux_ref[...]                                   # (tm, 8) f32: [is_bg, ch_r, ch_c, ch_f, label, 0,0,0]
    is_bg = aux[:, 0:1]
    labels = aux[:, 4:5].astype(jnp.int32)                  # padded rows carry -1

    col = jax.lax.broadcasted_iota(jnp.int32, (tm, c), 1)
    onehot = (col == labels).astype(jnp.float32)            # BCE target (bg rows -> bg column)

    # Group outer product on the MXU: col_masks rows 1..3 are rare/common/freq,
    # rows 0 and 4..7 are zero, so the is_bg / label columns of `aux` contribute
    # nothing.  Operands are 0/1 (label * zero-row = 0), exact in bf16.
    grp = jnp.dot(aux.astype(jnp.bfloat16),
                  colmasks_ref[...].astype(jnp.bfloat16),
                  preferred_element_type=jnp.float32)       # (tm, C)

    # sigmoid(x) >= score_thr  <=>  x >= logit(score_thr)   (no sigmoid on the EUP)
    base = (x >= logit_thr).astype(jnp.float32)

    # foreground rows: max(threshold mask, own-label one-hot)
    # background rows: chosen group columns + bg one-hot (threshold mask zeroed);
    # no clipping needed — group masks are disjoint and exclude the bg column.
    wmask = jnp.maximum(base * (1.0 - is_bg), grp + onehot)

    # binary_cross_entropy_with_logits, reduction='none'
    loss = jnp.maximum(x, 0.0) - x * onehot + jnp.log1p(jnp.exp(-jnp.abs(x)))

    # Sublane-aligned partial reduction: pure VPU adds each step, no per-step
    # cross-lane (XLU) reduce; the final scalar reduction happens once outside.
    part = (wmask * loss).reshape(tm // 8, 8, c).sum(axis=0)
    out_ref[...] += part


# ----------------------------------------------------------------------------
# Host-side glue: frequency groups + random background-row selection
# ----------------------------------------------------------------------------
def make_freq_group(n_c):
    """Deterministic synthetic stand-in for the LVIS json frequency groups.

    Original groups are 1-based category ids; the forward subtracts 1, so here we
    directly store 0-based column indices over the non-background columns [0, C-2].
    """
    fg_cols = np.arange(n_c - 1)
    n = fg_cols.shape[0]
    rare = fg_cols[: n // 4]
    common = fg_cols[n // 4: n // 2]
    freq = fg_cols[n // 2:]
    return {"rare": rare, "common": common, "freq": freq}


def build_aux(labels_np, n_i, n_c, freq_group, rng_seed=0):
    # TODO(synk): original hardcodes background class id 1203 (= n_c - 1 for LVIS v1);
    # we use n_c - 1 generically.
    bg_cls = n_c - 1
    is_bg_rows = (labels_np == bg_cls)
    bg_inds = np.nonzero(is_bg_rows)[0]
    n_bg = bg_inds.shape[0]

    # TODO(synk): original uses np.random.choice with global seed state; we use a
    # fixed deterministic Generator so the sampling is reproducible in-script.
    rng = np.random.default_rng(rng_seed)

    def choose_rows(frac):
        k = int(n_bg * frac)
        if k > 0:
            return np.sort(rng.choice(bg_inds, size=k, replace=False))
        return np.array([], dtype=np.int64)

    ch_r_rows = choose_rows(0.01)
    ch_c_rows = choose_rows(0.1)
    ch_f_rows = choose_rows(1.0)

    def row_flag(rows):
        f = np.zeros((n_i, 1), np.float32)
        f[rows, 0] = 1.0
        return f

    def col_mask(cols):
        m = np.zeros((1, n_c), np.float32)
        m[0, cols] = 1.0
        return m

    return {
        "is_bg": is_bg_rows.astype(np.float32).reshape(n_i, 1),
        "ch_r": row_flag(ch_r_rows), "ch_c": row_flag(ch_c_rows), "ch_f": row_flag(ch_f_rows),
        "rare_m": col_mask(freq_group["rare"]),
        "common_m": col_mask(freq_group["common"]),
        "freq_m": col_mask(freq_group["freq"]),
        "ch_r_rows": ch_r_rows, "ch_c_rows": ch_c_rows, "ch_f_rows": ch_f_rows,
        "bg_inds": bg_inds,
    }


# ----------------------------------------------------------------------------
# Pallas wrapper
# ----------------------------------------------------------------------------
def acsl_v1_loss_pallas(cls_logits, labels, aux, score_thr=0.7, tm=1024, n_row_shards=2):
    n_i, n_c = cls_logits.shape

    # Row tiling / sharding.  The class axis is left unpadded: a full-extent last
    # dim is a legal block even when n_c is not a multiple of 128, and this avoids
    # a whole extra HBM pass from jnp.pad over the N x C logits.
    n_row_shards = int(max(1, min(n_row_shards, _ceil_div(n_i, 8))))
    tm_eff = max(8, min(_round_up(tm, 8), _round_up(_ceil_div(n_i, n_row_shards), 8)))
    n_blocks_total = _ceil_div(n_i, tm_eff)                  # row blocks touching real data
    n_blocks = _ceil_div(n_blocks_total, n_row_shards)       # blocks per shard in the grid
    n_rows_aux = n_blocks_total * tm_eff

    logits = jnp.asarray(cls_logits, jnp.float32)            # unpadded (n_i, n_c)

    labels_np = np.asarray(labels).astype(np.int64)

    # Packed per-row aux stream (one (tm,8) DMA per step instead of labels+flags):
    # cols = [is_bg, chosen_rare, chosen_common, chosen_freq, label, 0, 0, 0].
    row_aux = np.zeros((n_rows_aux, 8), np.float32)
    row_aux[:, 4] = -1.0                                     # padded rows -> no one-hot hit
    row_aux[:n_i, 0] = aux["is_bg"][:, 0]
    row_aux[:n_i, 1] = aux["ch_r"][:, 0]
    row_aux[:n_i, 2] = aux["ch_c"][:, 0]
    row_aux[:n_i, 3] = aux["ch_f"][:, 0]
    row_aux[:n_i, 4] = labels_np.astype(np.float32)

    # Packed per-column group masks laid out for the MXU outer product:
    # rows = [0, rare, common, freq, 0, 0, 0, 0]  so  grp = row_aux @ col_masks.
    col_masks = np.zeros((8, n_c), np.float32)
    col_masks[1] = aux["rare_m"][0]
    col_masks[2] = aux["common_m"][0]
    col_masks[3] = aux["freq_m"][0]

    # Dropping the min(grp + onehot, 1) clip is only valid if the group masks are
    # pairwise disjoint and exclude the background column — assert it.
    overlap = col_masks[1] + col_masks[2] + col_masks[3]
    assert overlap.max() <= 1.0 and overlap[n_c - 1] == 0.0, \
        "rare/common/freq masks must be disjoint and exclude the background class"

    logit_thr = float(np.log(score_thr / (1.0 - score_thr)))
    kernel = functools.partial(_acsl_kernel, logit_thr=logit_thr, n_rows=n_i)

    # Clamp the row-block index so no block points fully past the data (can happen
    # when n_blocks_total doesn't divide evenly across shards); the in-kernel row
    # predicate (built from the *unclamped* program ids) zeroes duplicated rows.
    max_blk = n_blocks_total - 1
    row_map = lambda s, i: (jnp.minimum(s * n_blocks + i, max_blk), 0)

    # TODO(synk): on v7x consider pltpu.CORE_PARALLEL on the shard axis if plain
    # "parallel" does not split the grid across the two TensorCores.
    partials = pl.pallas_call(
        kernel,
        out_shape=jax.ShapeDtypeStruct((n_row_shards * 8, n_c), jnp.float32),
        grid_spec=pltpu.PrefetchScalarGridSpec(
            num_scalar_prefetch=0,
            grid=(n_row_shards, n_blocks),
            in_specs=[
                pl.BlockSpec((tm_eff, n_c), row_map),            # logits (unpadded, ragged tail)
                pl.BlockSpec((tm_eff, 8), row_map),              # packed row aux (flags + label)
                pl.BlockSpec((8, n_c), lambda s, i: (0, 0)),     # packed column group masks
            ],
            out_specs=pl.BlockSpec((8, n_c), lambda s, i: (s, 0)),
        ),
        compiler_params=pltpu.CompilerParams(
            dimension_semantics=("parallel", "arbitrary")),
    )(logits, jnp.asarray(row_aux), jnp.asarray(col_masks))

    return jnp.sum(partials) / n_i


# ----------------------------------------------------------------------------
# NumPy reference mirroring the PyTorch forward (loop structure kept literal)
# ----------------------------------------------------------------------------
def acsl_v1_loss_ref(cls_logits, labels, aux, freq_group, score_thr=0.7):
    logits = np.asarray(cls_logits, np.float64)
    labels = np.asarray(labels)
    n_i, n_c = logits.shape
    bg_cls = n_c - 1

    target = np.zeros_like(logits)
    sig = 1.0 / (1.0 + np.exp(-logits))
    wmask = (sig >= score_thr).astype(np.float64)

    for cls in np.unique(labels):
        inds = np.nonzero(labels == cls)[0]
        if cls == bg_cls:
            target[inds, bg_cls] = 1
            wmask[inds] = 0
            if aux["ch_r_rows"].size:
                wmask[np.ix_(aux["ch_r_rows"], freq_group["rare"])] = 1
            if aux["ch_c_rows"].size:
                wmask[np.ix_(aux["ch_c_rows"], freq_group["common"])] = 1
            if aux["ch_f_rows"].size:
                wmask[np.ix_(aux["ch_f_rows"], freq_group["freq"])] = 1
            wmask[inds, bg_cls] = 1
        else:
            target[inds, cls] = 1
            wmask[inds, cls] = 1

    loss = np.maximum(logits, 0) - logits * target + np.log1p(np.exp(-np.abs(logits)))
    return np.sum(wmask * loss) / n_i


# ----------------------------------------------------------------------------
if __name__ == "__main__":
    key = jax.random.PRNGKey(0)
    k1, k2 = jax.random.split(key)

    # Small stand-in for LVIS (real: n_c = 1204, bg class = C-1, N in the thousands).
    # n_i = 60 / n_c = 32 deliberately exercise the ragged row-tail path and the
    # unpadded (non-multiple-of-128) class axis path.
    n_i, n_c = 60, 32
    score_thr = 0.7

    cls_logits = jax.random.normal(k1, (n_i, n_c), dtype=jnp.float32) * 2.0
    labels = jax.random.randint(k2, (n_i,), 0, n_c, dtype=jnp.int32)

    freq_group = make_freq_group(n_c)
    aux = build_aux(np.asarray(labels), n_i, n_c, freq_group, rng_seed=0)

    out = acsl_v1_loss_pallas(cls_logits, labels, aux, score_thr=score_thr)
    out = jax.block_until_ready(out)

    ref = acsl_v1_loss_ref(cls_logits, labels, aux, freq_group, score_thr=score_thr)
    np.testing.assert_allclose(np.asarray(out, np.float64), ref, rtol=1e-5, atol=1e-5)

    print("KERNEL_OK")
</pallas_src>

<mosaic_0001>
module attributes {stable_mosaic.version = 11 : i64} {
  func.func @_acsl_kernel(%arg0: i32, %arg1: i32, %arg2: memref<32x32xf32, #tpu.memory_space<vmem>>, %arg3: memref<32x8xf32, #tpu.memory_space<vmem>>, %arg4: memref<8x32xf32, #tpu.memory_space<vmem>>, %arg5: memref<8x32xf32, #tpu.memory_space<vmem>>) attributes {dimension_semantics = [#tpu.dimension_semantics<parallel>, #tpu.dimension_semantics<arbitrary>], iteration_bounds = array<i64: 2, 1>, scalar_prefetch = 0 : i64, scratch_operands = 0 : i64, tpu.core_type = #tpu.core_type<tc>, window_params = [{transform_indices = @transform_0, window_bounds = array<i64: 32, 32>}, {transform_indices = @transform_1, window_bounds = array<i64: 32, 8>}, {pipeline_mode = #tpu.pipeline_mode<synchronous>, transform_indices = @transform_2, window_bounds = array<i64: 8, 32>}, {transform_indices = @transform_3, window_bounds = array<i64: 8, 32>}]} {
    %c0_i32 = arith.constant 0 : i32
    %0 = arith.cmpi eq, %arg1, %c0_i32 : i32
    %1 = arith.extui %0 : i1 to i32
    %c0_i32_0 = arith.constant 0 : i32
    %2 = arith.cmpi ne, %1, %c0_i32_0 : i32
    scf.if %2 {
      %cst_16 = arith.constant 0.000000e+00 : f32
      %55 = vector.broadcast %cst_16 : f32 to vector<8x32xf32>
      %c0_17 = arith.constant 0 : index
      %c0_18 = arith.constant 0 : index
      %56 = vector.load %arg5[%c0_17, %c0_18] : memref<8x32xf32, #tpu.memory_space<vmem>>, vector<8x32xf32>
      tpu.vector_store %arg5[%c0_17, %c0_18], %55 {strides = array<i32>} : memref<8x32xf32, #tpu.memory_space<vmem>>, vector<8x32xf32>,
    } else {
    }
    %c0 = arith.constant 0 : index
    %c0_1 = arith.constant 0 : index
    %3 = vector.load %arg2[%c0, %c0_1] : memref<32x32xf32, #tpu.memory_space<vmem>>, vector<32x32xf32>
    %c1_i32 = arith.constant 1 : i32
    %4 = arith.muli %arg0, %c1_i32 : i32
    %5 = arith.addi %4, %arg1 : i32
    %c32_i32 = arith.constant 32 : i32
    %6 = arith.muli %5, %c32_i32 : i32
    %7 = tpu.iota {dimensions = array<i32: 0>} : vector<32x1xi32>
    %8 = vector.broadcast %6 : i32 to vector<32x1xi32>
    %9 = arith.addi %7, %8 : vector<32x1xi32>
    %c60_i32 = arith.constant 60 : i32
    %10 = vector.broadcast %c60_i32 : i32 to vector<32x1xi32>
    %11 = arith.cmpi slt, %9, %10 : vector<32x1xi32>
    %cst = arith.constant -1.000000e+09 : f32
    %12 = vector.shape_cast %11 : vector<32x1xi1> to vector<32x1xi1>
    %13 = vector.broadcast %12 : vector<32x1xi1> to vector<32x32xi1>
    %14 = vector.broadcast %cst : f32 to vector<32x32xf32>
    %15 = arith.select %13, %3, %14 : vector<32x32xi1>, vector<32x32xf32>
    %c0_2 = arith.constant 0 : index
    %c0_3 = arith.constant 0 : index
    %16 = vector.load %arg3[%c0_2, %c0_3] : memref<32x8xf32, #tpu.memory_space<vmem>>, vector<32x8xf32>
    %17 = vector.extract_strided_slice %16 {offsets = [0, 0], sizes = [32, 1], strides = [1, 1]} : vector<32x8xf32> to vector<32x1xf32>
    %18 = vector.extract_strided_slice %16 {offsets = [0, 4], sizes = [32, 1], strides = [1, 1]} : vector<32x8xf32> to vector<32x1xf32>
    %19 = arith.fptosi %18 : vector<32x1xf32> to vector<32x1xi32>
    %20 = tpu.iota {dimensions = array<i32: 1>} : vector<32x32xi32>
    %21 = vector.broadcast %19 : vector<32x1xi32> to vector<32x32xi32>
    %22 = arith.cmpi eq, %20, %21 : vector<32x32xi32>
    %23 = arith.extui %22 : vector<32x32xi1> to vector<32x32xi32>
    %24 = arith.sitofp %23 : vector<32x32xi32> to vector<32x32xf32>
    %25 = arith.truncf %16 : vector<32x8xf32> to vector<32x8xbf16>
    %c0_4 = arith.constant 0 : index
    %c0_5 = arith.constant 0 : index
    %26 = vector.load %arg4[%c0_4, %c0_5] : memref<8x32xf32, #tpu.memory_space<vmem>>, vector<8x32xf32>
    %27 = arith.truncf %26 : vector<8x32xf32> to vector<8x32xbf16>
    %cst_6 = arith.constant dense<0.000000e+00> : vector<32x32xf32>
    %28 = tpu.matmul %25, %27, %cst_6 {dimension_numbers = #tpu.dot_dimension_numbers<[1], [0], [0], [1], [0, 0, 1, 1], [], []>} : vector<32x8xbf16>, vector<8x32xbf16>, vector<32x32xf32> -> vector<32x32xf32>
    %cst_7 = arith.constant 0.847297847 : f32
    %29 = vector.broadcast %cst_7 : f32 to vector<32x32xf32>
    %30 = arith.cmpf oge, %15, %29 : vector<32x32xf32>
    %31 = arith.extui %30 : vector<32x32xi1> to vector<32x32xi32>
    %32 = arith.sitofp %31 : vector<32x32xi32> to vector<32x32xf32>
    %cst_8 = arith.constant 1.000000e+00 : f32
    %33 = vector.broadcast %cst_8 : f32 to vector<32x1xf32>
    %34 = arith.subf %33, %17 : vector<32x1xf32>
    %35 = vector.broadcast %34 : vector<32x1xf32> to vector<32x32xf32>
    %36 = arith.mulf %32, %35 : vector<32x32xf32>
    %37 = arith.addf %28, %24 : vector<32x32xf32>
    %38 = arith.maximumf %36, %37 : vector<32x32xf32>
    %cst_9 = arith.constant 0.000000e+00 : f32
    %39 = vector.broadcast %cst_9 : f32 to vector<32x32xf32>
    %40 = arith.maximumf %15, %39 : vector<32x32xf32>
    %41 = arith.mulf %15, %24 : vector<32x32xf32>
    %42 = arith.subf %40, %41 : vector<32x32xf32>
    %43 = math.absf %15 : vector<32x32xf32>
    %cst_10 = arith.constant 0.000000e+00 : f32
    %44 = vector.broadcast %cst_10 : f32 to vector<32x32xf32>
    %45 = arith.subf %44, %43 : vector<32x32xf32>
    %46 = math.exp %45 : vector<32x32xf32>
    %47 = math.log1p %46 : vector<32x32xf32>
    %48 = arith.addf %42, %47 : vector<32x32xf32>
    %49 = arith.mulf %38, %48 : vector<32x32xf32>
    %50 = vector.shape_cast %49 : vector<32x32xf32> to vector<4x8x32xf32>
    %cst_11 = arith.constant dense<0.000000e+00> : vector<8x32xf32>
    %51 = vector.multi_reduction <add>, %50, %cst_11 [0] : vector<4x8x32xf32> to vector<8x32xf32>
    %c0_12 = arith.constant 0 : index
    %c0_13 = arith.constant 0 : index
    %52 = vector.load %arg5[%c0_12, %c0_13] : memref<8x32xf32, #tpu.memory_space<vmem>>, vector<8x32xf32>
    %53 = arith.addf %52, %51 : vector<8x32xf32>
    %c0_14 = arith.constant 0 : index
    %c0_15 = arith.constant 0 : index
    %54 = vector.load %arg5[%c0_14, %c0_15] : memref<8x32xf32, #tpu.memory_space<vmem>>, vector<8x32xf32>
    tpu.vector_store %arg5[%c0_14, %c0_15], %53 {strides = array<i32>} : memref<8x32xf32, #tpu.memory_space<vmem>>, vector<8x32xf32>,
    return
  }
  func.func @transform_0(%arg0: i32, %arg1: i32) -> (i32, i32) {
    %c1_i32 = arith.constant 1 : i32
    %0 = arith.muli %arg0, %c1_i32 : i32
    %1 = arith.addi %0, %arg1 : i32
    %c1_i32_0 = arith.constant 1 : i32
    %2 = arith.minsi %1, %c1_i32_0 : i32
    %c0_i32 = arith.constant 0 : i32
    %c0_i32_1 = arith.constant 0 : i32
    return %2, %c0_i32 : i32, i32
  }
  func.func @transform_1(%arg0: i32, %arg1: i32) -> (i32, i32) {
    %c1_i32 = arith.constant 1 : i32
    %0 = arith.muli %arg0, %c1_i32 : i32
    %1 = arith.addi %0, %arg1 : i32
    %c1_i32_0 = arith.constant 1 : i32
    %2 = arith.minsi %1, %c1_i32_0 : i32
    %c0_i32 = arith.constant 0 : i32
    %c0_i32_1 = arith.constant 0 : i32
    return %2, %c0_i32 : i32, i32
  }
  func.func @transform_2(%arg0: i32, %arg1: i32) -> (i32, i32) {
    %c0_i32 = arith.constant 0 : i32
    %c0_i32_0 = arith.constant 0 : i32
    %c0_i32_1 = arith.constant 0 : i32
    return %c0_i32, %c0_i32_0 : i32, i32
  }
  func.func @transform_3(%arg0: i32, %arg1: i32) -> (i32, i32) {
    %c0_i32 = arith.constant 0 : i32
    %c0_i32_0 = arith.constant 0 : i32
    return %arg0, %c0_i32 : i32, i32
  }
}

</mosaic_0001>

<llo_original>
// kernel: tpu_custom_call.1
$region0: #{tpu_custom_call.1}
  #allocation0 [shape = 'u32[]', space=smem, size = 0x4, offset = 0x4, fixed_abs, tag = 'smem constant byte address 0x4 - core index']
  #allocation1 [shape = 'u32[144,128]{1,0:T(1,128)}', space=vmem, size = 0x12000, scoped, tag = 'internal scratch']
  %s0 = inlined_call_operand.vmem [shape: f32[60,32], index: 0, kind: input, shape index: {}]
  %s1 = inlined_call_operand.vmem [shape: f32[64,8], index: 1, kind: input, shape index: {}]
  %s2 = inlined_call_operand.vmem [shape: f32[8,32], index: 2, kind: input, shape index: {}]
  %s3 = inlined_call_operand.hbm [shape: f32[16,32], index: 3, kind: output, shape index: {}]
  %s4 = sld [smem:[#allocation0]]
  $region49: #{tpu_custom_call.1} parent=0
    _
  %s6 = ssub.s32 1, %s4
  %s7 = scalar_select 0, %s6, %s4
  $region1: #{tpu_custom_call.1} parent=0
    #allocation2 [shape = 'u8[8192]{0}', space=vmem, size = 0x2000, scoped, tag = 'output window, operand 0']
    #allocation3 [shape = 's32[2]{0}', space=sflag, size = 0x8, scoped, tag = 'scoped memory for tpu_custom_call.1']
    %8 = vsyncpa [#allocation3], 0
    %s9 = scalar_lea.sflag [#allocation3], 1
    %10 = vsyncpa %s9, 0
    loop: start=0, step=1, limit=4
    $region2: #{tpu_custom_call.1} parent=1 // loop_pre_header
      _
    $region3: #{tpu_custom_call.1} parent=1 // loop_header
      %s12 = sphi 0, %s16
      %p13 = scmp.ge.s32.totalorder %s12, 4
      %s19 = sphi 0, %s31
      %s20 = sphi 0, %s27
      %s21 = sphi 0, %s19
      %s22 = sphi 0, %s20
      %s23 = sphi 0, %s21
      %s24 = sphi 0, %s22
      %s40 = sphi 0, %s42
      %s43 = sphi 0, %s40
      %s44 = sphi 0, %s43
      %s60 = sphi 0, %s44
      %s72 = sphi 0, %s74
      %s75 = sphi 0, %s72
      %s76 = sphi 0, %s75
      %s92 = sphi 0, %s76
      %s96 = sphi 0, %s96
      %s98 = sphi 0, %s96
      %s99 = sphi 0, %s98
      %s113 = sphi 0, %s99
      %s119 = sphi 0, %s121
      %s122 = sphi 0, %s119
      %s123 = sphi 0, %s122
      %s139 = sphi 0, %s123
    $region4: #{tpu_custom_call.1} parent=1 // loop_header_branch
      %15 = sbr.rel (%p13) target = $region8
    $region5: #{tpu_custom_call.1} parent=1 // loop_body
      %s17 = ssub.s32 %s12, 1
      %s18 = ssub.s32 %s12, 2
      %s25 = sadd.s32 1, %s20
      %p26 = scmp.ge.s32.totalorder %s25, 1
      %s27 = scalar_select %p26, 0, %s25
      %s28 = sadd.s32 1, %s19
      %s29 = scalar_select %p26, %s28, %s19
      %p30 = scmp.ge.s32.totalorder %s29, 2
      %s31 = scalar_select %p30, 0, %s29
      %s32 = sadd.s32 %s19, %s20
      %p33 = scmp.lt.s32.totalorder %s32, 1
      %s34 = scalar_select %p33, %s32, 1
      %s35 = sadd.s32 %s31, %s27
      %p36 = scmp.lt.s32.totalorder %s35, 1
      %s37 = scalar_select %p36, %s35, 1
      %s38 = ssub.s32 %s34, %s37
      %p39 = scmp.eq.s32.totalorder %s38, 0
      %s41 = sadd.s32 %s40, 1
      %s42 = scalar_select %p39, %s40, %s41
      %p45 = pneg %p39
      %p46 = scmp.eq.s32.totalorder %s12, 1
      %p47 = por %p45, %p46
      %p48 = scmp.ne.s32.totalorder %s40, %s43
      %p49 = scmp.eq.s32.totalorder %s12, 0
      %p50 = por %p48, %p49
      %p51 = scmp.ne.s32.totalorder %s40, %s43
      %p52 = scmp.eq.s32.totalorder %s17, 1
      %p53 = por %p51, %p52
      %p54 = scmp.ne.s32.totalorder %s43, %s44
      %p55 = scmp.eq.s32.totalorder %s17, 0
      %p56 = por %p54, %p55
      %p57 = scmp.ne.s32.totalorder %s43, %s44
      %p58 = scmp.eq.s32.totalorder %s18, 1
      %p59 = por %p57, %p58
      %p61 = scmp.ne.s32.totalorder %s44, %s60
      %p62 = scmp.eq.s32.totalorder %s18, 0
      %p63 = por %p61, %p62
      %s64 = sadd.s32 %s19, %s20
      %p65 = scmp.lt.s32.totalorder %s64, 1
      %s66 = scalar_select %p65, %s64, 1
      %s67 = sadd.s32 %s31, %s27
      %p68 = scmp.lt.s32.totalorder %s67, 1
      %s69 = scalar_select %p68, %s67, 1
      %s70 = ssub.s32 %s66, %s69
      %p71 = scmp.eq.s32.totalorder %s70, 0
      %s73 = sadd.s32 %s72, 1
      %s74 = scalar_select %p71, %s72, %s73
      %p77 = pneg %p71
      %p78 = scmp.eq.s32.totalorder %s12, 1
      %p79 = por %p77, %p78
      %p80 = scmp.ne.s32.totalorder %s72, %s75
      %p81 = scmp.eq.s32.totalorder %s12, 0
      %p82 = por %p80, %p81
      %p83 = scmp.ne.s32.totalorder %s72, %s75
      %p84 = scmp.eq.s32.totalorder %s17, 1
      %p85 = por %p83, %p84
      %p86 = scmp.ne.s32.totalorder %s75, %s76
      %p87 = scmp.eq.s32.totalorder %s17, 0
      %p88 = por %p86, %p87
      %p89 = scmp.ne.s32.totalorder %s75, %s76
      %p90 = scmp.eq.s32.totalorder %s18, 1
      %p91 = por %p89, %p90
      %p93 = scmp.ne.s32.totalorder %s76, %s92
      %p94 = scmp.eq.s32.totalorder %s18, 0
      %p95 = por %p93, %p94
      %s97 = sadd.s32 %s96, 1
      %p100 = scmp.eq.s32.totalorder %s12, 1
      %p101 = scmp.ne.s32.totalorder %s96, %s98
      %p102 = scmp.eq.s32.totalorder %s12, 0
      %p103 = por %p101, %p102
      %p104 = scmp.ne.s32.totalorder %s96, %s98
      %p105 = scmp.eq.s32.totalorder %s17, 1
      %p106 = por %p104, %p105
      %p107 = scmp.ne.s32.totalorder %s98, %s99
      %p108 = scmp.eq.s32.totalorder %s17, 0
      %p109 = por %p107, %p108
      %p110 = scmp.ne.s32.totalorder %s98, %s99
      %p111 = scmp.eq.s32.totalorder %s18, 1
      %p112 = por %p110, %p111
      %p114 = scmp.ne.s32.totalorder %s99, %s113
      %p115 = scmp.eq.s32.totalorder %s18, 0
      %p116 = por %p114, %p115
      %s117 = ssub.s32 %s19, %s31
      %p118 = scmp.eq.s32.totalorder %s117, 0
      %s120 = sadd.s32 %s119, 1
      %s121 = scalar_select %p118, %s119, %s120
      %p124 = pneg %p118
      %p125 = scmp.eq.s32.totalorder %s12, 1
      %p126 = por %p124, %p125
      %p127 = scmp.ne.s32.totalorder %s119, %s122
      %p128 = scmp.eq.s32.totalorder %s12, 0
      %p129 = por %p127, %p128
      %p130 = scmp.ne.s32.totalorder %s119, %s122
      %p131 = scmp.eq.s32.totalorder %s17, 1
      %p132 = por %p130, %p131
      %p133 = scmp.ne.s32.totalorder %s122, %s123
      %p134 = scmp.eq.s32.totalorder %s17, 0
      %p135 = por %p133, %p134
      %p136 = scmp.ne.s32.totalorder %s122, %s123
      %p137 = scmp.eq.s32.totalorder %s18, 1
      %p138 = por %p136, %p137
      %p140 = scmp.ne.s32.totalorder %s123, %s139
      %p141 = scmp.eq.s32.totalorder %s18, 0
      %p142 = por %p140, %p141
      %p143 = scmp.le.s32.totalorder 1, %s12
      %p144 = scmp.lt.s32.totalorder %s12, 3
      %p145 = pnand %p143, %p144
      %p146 = pneg %p145
      // Predicated region
      $region9: #{tpu_custom_call.1} parent=5 // pred_check
        _
      $region10: #{tpu_custom_call.1} parent=5 // pred_check_branch
        %148 = sbr.rel (%p145) target = $region12
      $region11: #{tpu_custom_call.1} parent=5 // pred_region
        %s149 = ssub.s32 %s12, 1
        // Predicated region
        $region13: #{tpu_custom_call.1} parent=11 // pred_check
          %p150 = pneg %p109
        $region14: #{tpu_custom_call.1} parent=11 // pred_check_branch
          %152 = sbr.rel (%p150) target = $region16
        $region15: #{tpu_custom_call.1} parent=11 // pred_region
          _
        $region16: #{tpu_custom_call.1} parent=11 // pred_fallthru
          _
      $region12: #{tpu_custom_call.1} parent=5 // pred_fallthru
        _
      %p153 = scmp.lt.s32.totalorder %s12, 2
      // Predicated region
      $region17: #{tpu_custom_call.1} parent=5 // pred_check
        %p154 = pneg %p153
      $region18: #{tpu_custom_call.1} parent=5 // pred_check_branch
        %156 = sbr.rel (%p154) target = $region20
      $region19: #{tpu_custom_call.1} parent=5 // pred_region
        // Predicated region
        $region21: #{tpu_custom_call.1} parent=19 // pred_check
          %p157 = pneg %p50
        $region22: #{tpu_custom_call.1} parent=19 // pred_check_branch
          %159 = sbr.rel (%p157) target = $region24
        $region23: #{tpu_custom_call.1} parent=19 // pred_region
          %s160 = sadd.s32 %s19, %s20
          %p161 = scmp.lt.s32.totalorder %s160, 1
          %s162 = scalar_select %p161, %s160, 1
          %s163 = smul.u32 4, %s162
          %p164 = scmp.lt.s32.totalorder %s163, 7
          %s165 = scalar_select %p164, %s163, 7
          %s166 = smul.addr %s165, 8
          %s167 = scalar_lea.vmem %s0, %s166
          %s168 = sadd.s32 %s19, %s20
          %p169 = scmp.lt.s32.totalorder %s168, 1
          %s170 = scalar_select %p169, %s168, 1
          %s171 = smul.u32 4, %s170
        $region24: #{tpu_custom_call.1} parent=19 // pred_fallthru
          _
        // Predicated region
        $region25: #{tpu_custom_call.1} parent=19 // pred_check
          %p172 = pneg %p82
        $region26: #{tpu_custom_call.1} parent=19 // pred_check_branch
          %174 = sbr.rel (%p172) target = $region28
        $region27: #{tpu_custom_call.1} parent=19 // pred_region
          %s175 = sadd.s32 %s19, %s20
          %p176 = scmp.lt.s32.totalorder %s175, 1
          %s177 = scalar_select %p176, %s175, 1
          %s178 = smul.u32 4, %s177
          %p179 = scmp.lt.s32.totalorder %s178, 7
          %s180 = scalar_select %p179, %s178, 7
          %s181 = smul.addr %s180, 8
          %s182 = scalar_lea.vmem %s1, %s181
          %s183 = sadd.s32 %s19, %s20
          %p184 = scmp.lt.s32.totalorder %s183, 1
          %s185 = scalar_select %p184, %s183, 1
          %s186 = smul.u32 4, %s185
        $region28: #{tpu_custom_call.1} parent=19 // pred_fallthru
          _
      $region20: #{tpu_custom_call.1} parent=5 // pred_fallthru
        _
      %p187 = scmp.le.s32.totalorder 1, %s12
      %p188 = scmp.lt.s32.totalorder %s12, 3
      %p189 = pnand %p187, %p188
      %p190 = pneg %p189
      // Predicated region
      $region29: #{tpu_custom_call.1} parent=5 // pred_check
        _
      $region30: #{tpu_custom_call.1} parent=5 // pred_check_branch
        %192 = sbr.rel (%p189) target = $region32
      $region31: #{tpu_custom_call.1} parent=5 // pred_region
        %s193 = ssub.s32 %s12, 1
        %s194 = sadd.s32 %s21, %s22
        %p195 = scmp.lt.s32.totalorder %s194, 1
        %s196 = scalar_select %p195, %s194, 1
        %s197 = smul.u32 4, %s196
        %p198 = scmp.lt.s32.totalorder %s197, 7
        %s199 = scalar_select %p198, %s197, 7
        %s200 = smul.addr %s199, 8
        %s201 = scalar_lea.vmem %s0, %s200
        %p202 = pneg %p56
        %p203 = pneg %p53
        %s204 = sadd.s32 %s21, %s22
        %p205 = scmp.lt.s32.totalorder %s204, 1
        %s206 = scalar_select %p205, %s204, 1
        %s207 = smul.u32 4, %s206
        %p208 = scmp.lt.s32.totalorder %s207, 7
        %s209 = scalar_select %p208, %s207, 7
        %s210 = smul.addr %s209, 8
        %s211 = scalar_lea.vmem %s1, %s210
        %p212 = pneg %p88
        %p213 = pneg %p85
        %p214 = pneg %p109
        %p215 = pneg %p106
        %p216 = pneg %p135
        %p217 = pneg %p132
        %s218 = sand.u32 %s122, 1
        %s219 = scalar_lea.sflag [#allocation3], %s218
        %s220 = sand.u32 %s122, 1
        %s221 = smul.addr %s220, 8
        %s222 = scalar_lea.vmem [#allocation2], %s221
        %s223 = sadd.s32 %s21, %s22
        %p224 = scmp.lt.s32.totalorder %s223, 1
        %s225 = scalar_select %p224, %s223, 1
        %s226 = smul.u32 4, %s225
        %p227 = scmp.lt.s32.totalorder %s226, 7
        %s228 = scalar_select %p227, %s226, 7
        %s229 = smul.addr %s228, 8
        %s230 = scalar_lea.vmem %s0, %s229
        %s231 = sadd.s32 %s21, %s22
        %p232 = scmp.lt.s32.totalorder %s231, 1
        %s233 = scalar_select %p232, %s231, 1
        %s234 = smul.u32 4, %s233
        %s235 = sadd.s32 %s21, %s22
        %p236 = scmp.lt.s32.totalorder %s235, 1
        %s237 = scalar_select %p236, %s235, 1
        %s238 = smul.u32 4, %s237
        %p239 = scmp.lt.s32.totalorder %s238, 7
        %s240 = scalar_select %p239, %s238, 7
        %s241 = smul.addr %s240, 8
        %s242 = scalar_lea.vmem %s1, %s241
        %s243 = sadd.s32 %s21, %s22
        %p244 = scmp.lt.s32.totalorder %s243, 1
        %s245 = scalar_select %p244, %s243, 1
        %s246 = smul.u32 4, %s245
        %p248 = scmp.eq.s32.totalorder %s22, 0
        // Predicated region
        $region33: #{tpu_custom_call.1} parent=31 // pred_check
          %p249 = pneg %p248
        $region34: #{tpu_custom_call.1} parent=31 // pred_check_branch
          %251 = sbr.rel (%p249) target = $region36
        $region35: #{tpu_custom_call.1} parent=31 // pred_region
          %vm252 = vcmask 261120
          %253 = vst.msk [vmem:[%s222] sm:$0xff] %vm252, 0.0
        $region36: #{tpu_custom_call.1} parent=31 // pred_fallthru
          _
        %v254 = vld [vmem:[%s230] sm:$0xff]
        %v255 = vld [vmem:[%s230 + $0x8] sm:$0xff]
        %v256 = vld [vmem:[%s230 + $0x10] sm:$0xff]
        %v257 = vld [vmem:[%s230 + $0x18] sm:$0xff]
        %s258 = sadd.s32 %s21, %s22
        %s259 = smul.u32 %s258, 32
        %v260 = vlaneseq
        %v261 = vshrl.u32 %v260, 7
        %v262 = vadd.s32 %v261, 8
        %v263 = vadd.s32 %v261, 16
        %v264 = vadd.s32 %v261, 24
        %v265 = vstv %s259
        %v266 = vadd.s32 %v261, %v265
        %v267 = vadd.s32 %v262, %v265
        %v268 = vadd.s32 %v263, %v265
        %v269 = vadd.s32 %v264, %v265
        %vm270 = vcmp.lt.s32.totalorder %v266, 60
        %vm271 = vcmp.lt.s32.totalorder %v267, 60
        %vm272 = vcmp.lt.s32.totalorder %v268, 60
        %vm273 = vcmp.lt.s32.totalorder %v269, 60
        %v274 = vsel %vm270, 1, 0
        %v275 = vsel %vm271, 1, 0
        %v276 = vsel %vm272, 1, 0
        %v277 = vsel %vm273, 1, 0
        %vm278 = vcmp.eq.s32.totalorder %v274, 1
        %vm279 = vcmp.eq.s32.totalorder %v275, 1
        %vm280 = vcmp.eq.s32.totalorder %v276, 1
        %vm281 = vcmp.eq.s32.totalorder %v277, 1
        %v282 = vsel %vm278, %v254, -1e+09
        %v283 = vsel %vm279, %v255, -1e+09
        %v284 = vsel %vm280, %v256, -1e+09
        %v285 = vsel %vm281, %v257, -1e+09
        %v286 = vld [vmem:[%s242] sm:$0xff]
        %v287 = vld [vmem:[%s242 + $0x8] sm:$0xff]
        %v288 = vld [vmem:[%s242 + $0x10] sm:$0xff]
        %v289 = vld [vmem:[%s242 + $0x18] sm:$0xff]
        %v290 = vcvt.f32.s32.to.zero.pseudo %v286
        %v291 = vcvt.f32.s32.to.zero.pseudo %v287
        %v292 = vcvt.f32.s32.to.zero.pseudo %v288
        %v293 = vcvt.f32.s32.to.zero.pseudo %v289
        %v294 = vlaneseq
        %v295 = vand.u32 %v294, 127
        %296 = vset.pattern.permute.xlu0 4
        %297 = vperm.xlu0 %296, %v290
        %v298 = vpop.permute.xlu0 %297
        %299 = vset.pattern.permute.xlu0 4
        %300 = vperm.xlu0 %299, %v291
        %v301 = vpop.permute.xlu0 %300
        %302 = vset.pattern.permute.xlu0 4
        %303 = vperm.xlu0 %302, %v292
        %v304 = vpop.permute.xlu0 %303
        %305 = vset.pattern.permute.xlu0 4
        %306 = vperm.xlu0 %305, %v293
        %v307 = vpop.permute.xlu0 %306
        %vm308 = vcmp.eq.s32.totalorder %v295, %v298
        %vm309 = vcmp.eq.s32.totalorder %v295, %v301
        %vm310 = vcmp.eq.s32.totalorder %v295, %v304
        %vm311 = vcmp.eq.s32.totalorder %v295, %v307
        %v312 = vsel %vm308, 1, 0
        %v313 = vsel %vm309, 1, 0
        %v314 = vsel %vm310, 1, 0
        %v315 = vsel %vm311, 1, 0
        %v316 = vcvt.s32.f32 %v312
        %v317 = vcvt.s32.f32 %v313
        %v318 = vcvt.s32.f32 %v314
        %v319 = vcvt.s32.f32 %v315
        %v320 = vpack.c.bf16 %v287, %v286
        %v321 = vpack.c.bf16 %v289, %v288
        %v322 = vld [vmem:[%s2] sm:$0xff]
        %v323 = vpack.c.bf16 %v322, %v322
        %vm324 = vcmp.ge.f32.partialorder %v282, 0.84729785
        %vm325 = vcmp.ge.f32.partialorder %v283, 0.84729785
        %vm326 = vcmp.ge.f32.partialorder %v284, 0.84729785
        %vm327 = vcmp.ge.f32.partialorder %v285, 0.84729785
        %v328 = vsel %vm324, 1, 0
        %v329 = vsel %vm325, 1, 0
        %v330 = vsel %vm326, 1, 0
        %v331 = vsel %vm327, 1, 0
        %v332 = vcvt.s32.f32 %v328
        %v333 = vcvt.s32.f32 %v329
        %v334 = vcvt.s32.f32 %v330
        %v335 = vcvt.s32.f32 %v331
        %v336 = vsub.f32 1.0, %v286
        %v337 = vsub.f32 1.0, %v287
        %v338 = vsub.f32 1.0, %v288
        %v339 = vsub.f32 1.0, %v289
        %341 = vset.pattern.permute.xlu0 0
        %342 = vperm.xlu0 %341, %v336
        %v343 = vpop.permute.xlu0 %342
        %346 = vset.pattern.permute.xlu0 0
        %347 = vperm.xlu0 %346, %v337
        %v348 = vpop.permute.xlu0 %347
        %351 = vset.pattern.permute.xlu0 0
        %352 = vperm.xlu0 %351, %v338
        %v353 = vpop.permute.xlu0 %352
        %356 = vset.pattern.permute.xlu0 0
        %357 = vperm.xlu0 %356, %v339
        %v358 = vpop.permute.xlu0 %357
        %v360 = vmul.f32 %v332, %v343
        %v361 = vmul.f32 %v333, %v348
        %v362 = vmul.f32 %v334, %v353
        %v363 = vmul.f32 %v335, %v358
        %vm364 = vcmask 64512
        %v366 = vsel %vm364, %v320, 0
        %v369 = vsel %vm364, %v321, 0
        %vm371 = vcmask 1043456
        %v373 = vsel %vm371, %v323, 0
        %375 = vmatprep.subr.bf16.mxu0 0
        %376 = vmatpush1.bf16.msra.mxu0 0
        %377 = vmatprep.subr.bf16.mxu0 0
        %378 = vmatpush1.bf16.msra.mxu0 0
        %379 = vmatprep.subr.bf16.mxu0 0
        %380 = vmatpush1.bf16.msra.mxu0 0
        %381 = vmatprep.subr.bf16.mxu0 0
        %382 = vmatpush1.bf16.msra.mxu0 0
        %383 = vmatprep.subr.bf16.mxu0 0
        %384 = vmatpush1.bf16.msra.mxu0 0
        %385 = vmatprep.subr.bf16.mxu0 0
        %386 = vmatpush1.bf16.msra.mxu0 0
        %387 = vmatprep.subr.bf16.mxu0 0
        %388 = vmatpush1.bf16.msra.mxu0 0
        %389 = vmatprep.subr.bf16.mxu0 0
        %390 = vmatpush1.bf16.msra.mxu0 %v373
        %391 = vmatprep.subr.bf16.mxu0 0
        %392 = vmatpush2.bf16.msra.mxu0 0
        %393 = vmatprep.subr.bf16.mxu0 0
        %394 = vmatpush2.bf16.msra.mxu0 0
        %395 = vmatprep.subr.bf16.mxu0 0
        %396 = vmatpush2.bf16.msra.mxu0 0
        %397 = vmatprep.subr.bf16.mxu0 0
        %398 = vmatpush2.bf16.msra.mxu0 0
        %399 = vmatprep.subr.bf16.mxu0 0
        %400 = vmatpush2.bf16.msra.mxu0 0
        %401 = vmatprep.subr.bf16.mxu0 0
        %402 = vmatpush2.bf16.msra.mxu0 0
        %403 = vmatprep.subr.bf16.mxu0 0
        %404 = vmatpush2.bf16.msra.mxu0 0
        %405 = vmatprep.subr.bf16.mxu0 0
        %406 = vmatpush2.bf16.msra.mxu0 0
        %407 = vmatprep.mubr.bf16.mxu0 0
        %408 = vmatmul.mubr.bf16.gmra.mxu0 %v366
        %v409 = vpop.f32.mrf.mxu0
        %v410 = vadd.f32 %v316, %v409
        %v411 = vpop.f32.mrf.mxu0
        %v412 = vpop.f32.mrf.mxu0
        %v413 = vadd.f32 %v317, %v412
        %v414 = vpop.f32.mrf.mxu0
        %415 = vmatprep.mubr.bf16.mxu0 0
        %416 = vmatmul.mubr.bf16.gmra.mxu0 %v369
        %v417 = vpop.f32.mrf.mxu0
        %v418 = vadd.f32 %v318, %v417
        %v419 = vpop.f32.mrf.mxu0
        %v420 = vpop.f32.mrf.mxu0
        %v421 = vadd.f32 %v319, %v420
        %v422 = vpop.f32.mrf.mxu0
        %423 = vdwg.mxu0
        %v424 = vmax.f32 %v360, %v410
        %v425 = vmax.f32 %v361, %v413
        %v426 = vmax.f32 %v362, %v418
        %v427 = vmax.f32 %v363, %v421
        %v428 = vmax.f32 %v282, 0.0
        %v429 = vmax.f32 %v283, 0.0
        %v430 = vmax.f32 %v284, 0.0
        %v431 = vmax.f32 %v285, 0.0
        %v432 = vmul.f32 %v282, %v316
        %v433 = vmul.f32 %v283, %v317
        %v434 = vmul.f32 %v284, %v318
        %v435 = vmul.f32 %v285, %v319
        %v436 = vsub.f32 %v428, %v432
        %v437 = vsub.f32 %v429, %v433
        %v438 = vsub.f32 %v430, %v434
        %v439 = vsub.f32 %v431, %v435
        %v440 = vand.u32 2147483647, %v282
        %v441 = vand.u32 2147483647, %v283
        %v442 = vand.u32 2147483647, %v284
        %v443 = vand.u32 2147483647, %v285
        %v444 = vsub.f32 0.0, %v440
        %v445 = vsub.f32 0.0, %v441
        %v446 = vsub.f32 0.0, %v442
        %v447 = vsub.f32 0.0, %v443
        %v448 = vmul.f32 %v444, 1.442695
        %v449 = vpow.pop %v448
        %v450 = vmul.f32 %v445, 1.442695
        %v451 = vpow.pop %v450
        %v452 = vmul.f32 %v446, 1.442695
        %v453 = vpow.pop %v452
        %v454 = vmul.f32 %v447, 1.442695
        %v455 = vpow.pop %v454
        %v456 = vadd.f32 %v449, 1.0
        %v457 = vlog2.pop %v456
        %v458 = vmul.f32 %v457, 0.6931472
        %v459 = vmul.f32 -0.5, %v449
        %v460 = vadd.f32 %v459, 1.0
        %v461 = vmul.f32 %v460, %v449
        %v462 = vand.u32 2147483647, %v449
        %vm463 = vcmp.lt.f32.partialorder %v462, 0.0004427343
        %v464 = vsel %vm463, %v461, %v458
        %v465 = vadd.f32 %v451, 1.0
        %v466 = vlog2.pop %v465
        %v467 = vmul.f32 %v466, 0.6931472
        %v468 = vmul.f32 -0.5, %v451
        %v469 = vadd.f32 %v468, 1.0
        %v470 = vmul.f32 %v469, %v451
        %v471 = vand.u32 2147483647, %v451
        %vm472 = vcmp.lt.f32.partialorder %v471, 0.0004427343
        %v473 = vsel %vm472, %v470, %v467
        %v474 = vadd.f32 %v453, 1.0
        %v475 = vlog2.pop %v474
        %v476 = vmul.f32 %v475, 0.6931472
        %v477 = vmul.f32 -0.5, %v453
        %v478 = vadd.f32 %v477, 1.0
        %v479 = vmul.f32 %v478, %v453
        %v480 = vand.u32 2147483647, %v453
        %vm481 = vcmp.lt.f32.partialorder %v480, 0.0004427343
        %v482 = vsel %vm481, %v479, %v476
        %v483 = vadd.f32 %v455, 1.0
        %v484 = vlog2.pop %v483
        %v485 = vmul.f32 %v484, 0.6931472
        %v486 = vmul.f32 -0.5, %v455
        %v487 = vadd.f32 %v486, 1.0
        %v488 = vmul.f32 %v487, %v455
        %v489 = vand.u32 2147483647, %v455
        %vm490 = vcmp.lt.f32.partialorder %v489, 0.0004427343
        %v491 = vsel %vm490, %v488, %v485
        %v492 = vadd.f32 %v436, %v464
        %v493 = vadd.f32 %v437, %v473
        %v494 = vadd.f32 %v438, %v482
        %v495 = vadd.f32 %v439, %v491
        %v496 = vmul.f32 %v424, %v492
        %v497 = vmul.f32 %v425, %v493
        %v498 = vmul.f32 %v426, %v494
        %v499 = vmul.f32 %v427, %v495
        %vm500 = vcmask 261120
        %v501 = vsel %vm500, %v496, 0.0
        %v502 = vsel %vm500, %v497, 0.0
        %v503 = vadd.f32 %v501, %v502
        %v504 = vsel %vm500, %v498, 0.0
        %v505 = vadd.f32 %v503, %v504
        %v506 = vsel %vm500, %v499, 0.0
        %v507 = vadd.f32 %v505, %v506
        %v508 = vld [vmem:[%s222] sm:$0xff]
        %v509 = vadd.f32 %v508, %v507
        %510 = vst.msk [vmem:[%s222] sm:$0xff] %vm500, %v509
        %s511 = sand.u32 %s122, 1
        %s512 = scalar_lea.sflag [#allocation3], %s511
        %s513 = sand.u32 %s122, 1
        %s514 = smul.addr %s513, 8
        %s515 = scalar_lea.vmem [#allocation2], %s514
        // Predicated region
        $region37: #{tpu_custom_call.1} parent=31 // pred_check
          %p516 = pneg %p132
        $region38: #{tpu_custom_call.1} parent=31 // pred_check_branch
          %518 = sbr.rel (%p516) target = $region40
        $region39: #{tpu_custom_call.1} parent=31 // pred_region
          %s520 = ssub.s32 128, 128
          %521 = vsyncadd %s512, %s520
          %s522 = smul.addr %s21, 128
          %s523 = scalar_lea.hbm %s3, %s522
          %s525 = sshll.u32 %s515, 4
          %s526 = int_to_ptr.vmem [resolvable:$true] %s525
          %528 = dma.vmem_to_hbm [thread:$0]  %s526, 128, %s523, %s512
        $region40: #{tpu_custom_call.1} parent=31 // pred_fallthru
          _
      $region32: #{tpu_custom_call.1} parent=5 // pred_fallthru
        _
      %p529 = scmp.le.s32.totalorder 2, %s12
      // Predicated region
      $region41: #{tpu_custom_call.1} parent=5 // pred_check
        %p530 = pneg %p529
      $region42: #{tpu_custom_call.1} parent=5 // pred_check_branch
        %532 = sbr.rel (%p530) target = $region44
      $region43: #{tpu_custom_call.1} parent=5 // pred_region
        %s533 = ssub.s32 %s12, 2
        // Predicated region
        $region45: #{tpu_custom_call.1} parent=43 // pred_check
          %p534 = pneg %p138
        $region46: #{tpu_custom_call.1} parent=43 // pred_check_branch
          %536 = sbr.rel (%p534) target = $region48
        $region47: #{tpu_custom_call.1} parent=43 // pred_region
          %s537 = sand.u32 %s123, 1
          %s538 = scalar_lea.sflag [#allocation3], %s537
          %s539 = sand.u32 %s123, 1
          %s540 = smul.addr %s539, 8
          %s541 = scalar_lea.vmem [#allocation2], %s540
          %542 = dma.done %s538, 128
        $region48: #{tpu_custom_call.1} parent=43 // pred_fallthru
          _
      $region44: #{tpu_custom_call.1} parent=5 // pred_fallthru
        _
    $region6: #{tpu_custom_call.1} parent=1 // loop_footer
      %s16 = sadd.s32 1, %s12
    $region7: #{tpu_custom_call.1} parent=1 // loop_footer_branch
      %11 = sbr.rel target = $region3
    $region8: #{tpu_custom_call.1} parent=1 // loop_exit
      _
    %543 = vsyncpa [#allocation3], 1
    %s544 = scalar_lea.sflag [#allocation3], 1
    %545 = vsyncpa %s544, 1

</llo_original>
